<compile_context>
chip_gen: v7x
topology: tpu7x:2x2x1
jax: 0.10.0
libtpu: 0.0.40
codegen_flags: <defaults>
</compile_context>

<pallas_src>
import math
import random

import numpy as np
import jax
import jax.numpy as jnp
from jax.experimental import pallas as pl
from jax.experimental.pallas import tpu as pltpu


# -----------------------------------------------------------------------------
# __init__-time buffer construction (dense numpy stand-in for scipy.sparse)
# -----------------------------------------------------------------------------
def calc_A_hat(adj_matrix: np.ndarray) -> np.ndarray:
    nnodes = adj_matrix.shape[0]
    A = adj_matrix + np.eye(nnodes)
    D_vec = np.sum(A, axis=1)
    D_vec_invsqrt_corr = 1.0 / D_vec          # faithful: original uses 1/D here
    return A @ np.diag(D_vec_invsqrt_corr)


def calc_ppr_exact(adj_matrix: np.ndarray, alpha: float) -> np.ndarray:
    nnodes = adj_matrix.shape[0]
    M = calc_A_hat(adj_matrix)
    A_inner = np.eye(nnodes) - (1.0 - alpha) * M
    return (alpha * np.linalg.inv(A_inner)).astype(np.float32)


def mask_adj_matrix(adj_matrix: np.ndarray) -> np.ndarray:
    nnodes = adj_matrix.shape[0]
    masked_n_edges = 100
    influenced_n_nodes = int(math.sqrt(masked_n_edges / 2))
    influenced_nodes = random.sample(range(1, nnodes), influenced_n_nodes)
    masked = adj_matrix.copy()
    for i in range(len(influenced_nodes)):
        for j in range(i + 1, len(influenced_nodes)):
            masked[influenced_nodes[i], influenced_nodes[j]] = 0
            masked[influenced_nodes[j], influenced_nodes[i]] = 0
    return masked


def track_ppr(adj_matrix: np.ndarray, masked_adj_matrix: np.ndarray,
              ppr_mat: np.ndarray, alpha: float) -> np.ndarray:
    nnodes = adj_matrix.shape[0]
    A = masked_adj_matrix + np.eye(nnodes)
    D_vec = np.sum(A, axis=1)
    M = A @ np.diag(1.0 / np.sqrt(D_vec))

    A_prime = adj_matrix + np.eye(nnodes)
    D_vec_prime = np.sum(A_prime, axis=1)
    M_prime = A_prime @ np.diag(1.0 / np.sqrt(D_vec_prime))

    diff_matrix = M_prime - M
    pushout = alpha * diff_matrix @ ppr_mat.T
    acc_pushout = pushout.copy()
    temp = alpha * M_prime
    acc_pushout += temp @ pushout
    num_itr = 1
    for _ in range(num_itr):
        new_temp = temp * alpha @ M_prime
        acc_pushout += new_temp @ pushout
        temp = new_temp
    t_ppr = ppr_mat + acc_pushout.T
    return t_ppr.astype(np.float32)


def _round_up(x: int, m: int) -> int:
    return ((x + m - 1) // m) * m


# -----------------------------------------------------------------------------
# Pallas kernel: out[b, :] = mat[idx[b], :] @ predictions
# -----------------------------------------------------------------------------
def _sdg_kernel(idx_ref, mat_hbm, pred_ref, out_ref, rows_vmem, sems):
    # idx_ref  : (B_pad,)           int32  SMEM (scalar prefetch)
    # mat_hbm  : (N, N)             f32    HBM (memory_space=pl.ANY, manual DMA)
    # pred_ref : (N, C_pad)         f32    VMEM (constant block index -> loaded once)
    # out_ref  : (TILE_B, C_pad)    f32    VMEM output tile (lane-dense)
    # rows_vmem: (2, TILE_B, N)     f32    double-buffered gather scratch
    # sems     : (2,)               DMA semaphores (one per slot)
    i = pl.program_id(0)
    nsteps = pl.num_programs(0)
    tile_b = out_ref.shape[0]

    def issue_gather(tile_idx):
        # Gather TILE_B rows of `mat` for batch tile `tile_idx` into slot
        # tile_idx % 2.  Each copy is one contiguous N*4-byte HBM row.
        slot = tile_idx % 2
        base = tile_idx * tile_b

        @pl.loop(0, tile_b)
        def _start(b):
            row = idx_ref[base + b]
            pltpu.make_async_copy(
                mat_hbm.at[pl.ds(row, 1)],              # (1, N) HBM row
                rows_vmem.at[slot, pl.ds(b, 1)],        # (1, N) VMEM dest row
                sems.at[slot],
            ).start()

    # Prologue: fill slot 0 with batch tile 0 on the first grid step.
    # (Grid axis is "arbitrary"/sequential, so this is the global first step.)
    @pl.when(i == 0)
    def _prologue():
        issue_gather(0)

    # Prefetch the next batch tile into the other slot BEFORE waiting on the
    # current one, so its DMAs are already queued while we drain + compute.
    @pl.when(i + 1 < nsteps)
    def _prefetch():
        issue_gather(i + 1)

    # Drain the current slot with ONE wait: all TILE_B copies signal the same
    # semaphore, and DMA semaphores count bytes, so a descriptor spanning the
    # whole (TILE_B, N) slot waits for exactly the sum of the row copies.
    slot = i % 2
    pltpu.make_async_copy(
        rows_vmem.at[slot], rows_vmem.at[slot], sems.at[slot]).wait()

    # One MXU matmul: (TILE_B, N) x (N, C_pad) -> (TILE_B, C_pad), lane-dense.
    out_ref[...] = jnp.dot(
        rows_vmem[slot], pred_ref[...],
        preferred_element_type=jnp.float32,
    ).astype(out_ref.dtype)


def sdg_forward(mat: jnp.ndarray, predictions: jnp.ndarray, idx: jnp.ndarray,
                *, tile_b: int = 128, lane: int = 128) -> jnp.ndarray:
    """Pallas implementation of SDG.forward (drop_prob=None -> dropout is identity)."""
    N, N2 = mat.shape
    assert N == N2
    Np, C = predictions.shape
    assert Np == N
    B = idx.shape[0]

    # Lane-dense output: pad C up to a multiple of 128.
    c_pad = max(lane, _round_up(C, lane))
    # Batch tile: multiple of 8 (sublane), no larger than needed for small B.
    tile_b = _round_up(min(tile_b, _round_up(B, 8)), 8)
    b_pad = _round_up(B, tile_b)

    idx_pad = jnp.pad(idx.astype(jnp.int32), (0, b_pad - B))
    pred_pad = predictions if c_pad == C else jnp.pad(
        predictions, ((0, 0), (0, c_pad - C)))
    mat = mat.astype(jnp.float32)
    pred_pad = pred_pad.astype(jnp.float32)
    # NOTE: on v6e/v7x, casting mat/pred_pad to bfloat16 here (keeping f32
    # accumulation via preferred_element_type) halves HBM/VMEM gather bytes;
    # kept f32 for exact parity with the PyTorch float32 module.

    grid = (b_pad // tile_b,)

    # Explicit VMEM budget: double-buffered gathered rows + (conservatively
    # double-buffered) resident predictions + double-buffered output tile.
    rows_bytes = 2 * tile_b * N * 4
    pred_bytes = 2 * N * c_pad * 4
    out_bytes = 2 * tile_b * c_pad * 4
    vmem_needed = rows_bytes + pred_bytes + out_bytes + (1 << 20)
    vmem_limit = int(min(max(vmem_needed, 32 * 1024 * 1024), 64 * 1024 * 1024))

    cost = pl.CostEstimate(
        flops=2 * b_pad * N * c_pad,
        transcendentals=0,
        bytes_accessed=b_pad * N * 4 + N * c_pad * 4 + b_pad * c_pad * 4,
    )

    out_pad = pl.pallas_call(
        _sdg_kernel,
        out_shape=jax.ShapeDtypeStruct((b_pad, c_pad), jnp.float32),
        grid_spec=pltpu.PrefetchScalarGridSpec(
            num_scalar_prefetch=1,                       # idx -> SMEM
            grid=grid,
            in_specs=[
                pl.BlockSpec(memory_space=pl.ANY),       # mat stays in HBM
                pl.BlockSpec((N, c_pad), lambda i, idx_ref: (0, 0)),  # pred resident
            ],
            out_specs=pl.BlockSpec((tile_b, c_pad), lambda i, idx_ref: (i, 0)),
            scratch_shapes=[
                pltpu.VMEM((2, tile_b, N), jnp.float32),  # double-buffered rows
                pltpu.SemaphoreType.DMA((2,)),            # one sem per slot
            ],
        ),
        compiler_params=pltpu.CompilerParams(
            # Sequential grid: required for the `i == 0` prologue of the
            # manual double-buffered gather (kernel is HBM/DMA-issue bound,
            # so megacore sharding would gain little anyway).
            dimension_semantics=("arbitrary",),
            vmem_limit_bytes=vmem_limit,
        ),
        cost_estimate=cost,
    )(idx_pad, mat, pred_pad)

    return out_pad[:B, :C]


# -----------------------------------------------------------------------------
# Demo
# -----------------------------------------------------------------------------
if __name__ == "__main__":
    # Deterministic synthetic graph (dense symmetric 0/1 adjacency, no self loops).
    N = 256         # nodes
    C = 16          # prediction channels
    B = 256         # number of gathered indices (-> grid of 2 tiles)
    alpha = 0.1

    random.seed(0)
    np_rng = np.random.default_rng(0)
    adj = (np_rng.random((N, N)) < 0.05).astype(np.float64)
    adj = np.triu(adj, 1)
    adj = adj + adj.T                      # symmetric, zero diagonal

    # SDG.__init__ : build tracked-PPR buffer `mat`
    masked_adj = mask_adj_matrix(adj)
    ppr_mat = calc_ppr_exact(masked_adj, alpha)
    t_ppr = track_ppr(adj, masked_adj, ppr_mat, alpha)   # (N, N) float32
    mat = jnp.asarray(t_ppr, dtype=jnp.float32)

    # Forward inputs (drop_prob=None so dropout is the identity).
    key = jax.random.PRNGKey(0)
    kp, ki = jax.random.split(key)
    predictions = jax.random.normal(kp, (N, C), dtype=jnp.float32)
    idx = jax.random.randint(ki, (B,), 0, N, dtype=jnp.int32)

    out = jax.block_until_ready(sdg_forward(mat, predictions, idx))
    assert out.shape == (B, C)

    # Cross-check against a float64 host reference of `mat[idx] @ predictions`.
    ref = np.asarray(t_ppr, dtype=np.float64)[np.asarray(idx)] @ \
        np.asarray(predictions, dtype=np.float64)
    np.testing.assert_allclose(np.asarray(out), ref, rtol=1e-4, atol=1e-4)

    print("KERNEL_OK")
</pallas_src>

<mosaic_0001>
module attributes {stable_mosaic.version = 11 : i64} {
  func.func @_sdg_kernel(%arg0: i32, %arg1: memref<256xi32, #tpu.memory_space<smem>>, %arg2: memref<256x256xf32, #tpu.memory_space<any>>, %arg3: memref<256x128xf32, #tpu.memory_space<vmem>>, %arg4: memref<128x128xf32, #tpu.memory_space<vmem>>, %arg5: memref<2x128x256xf32, #tpu.memory_space<vmem>>, %arg6: memref<2x!tpu.dma_semaphore, #tpu.memory_space<semaphore_mem>>) attributes {dimension_semantics = [#tpu.dimension_semantics<arbitrary>], iteration_bounds = array<i64: 2>, scalar_prefetch = 1 : i64, scratch_operands = 2 : i64, tpu.core_type = #tpu.core_type<tc>, window_params = [{}, {pipeline_mode = #tpu.pipeline_mode<synchronous>, transform_indices = @transform_1, window_bounds = array<i64: 256, 128>}, {transform_indices = @transform_2, window_bounds = array<i64: 128, 128>}]} {
    %c0_i32 = arith.constant 0 : i32
    %0 = arith.cmpi eq, %arg0, %c0_i32 : i32
    %1 = arith.extui %0 : i1 to i32
    %c0_i32_0 = arith.constant 0 : i32
    %2 = arith.cmpi ne, %1, %c0_i32_0 : i32
    scf.if %2 {
      %c0_i32_17 = arith.constant 0 : i32
      %c128_i32 = arith.constant 128 : i32
      %29 = arith.addi %c0_i32_17, %c128_i32 : i32
      %c1_i32_18 = arith.constant 1 : i32
      scf.for %arg7 = %c0_i32_17 to %29 step %c1_i32_18  : i32 {
        %c1_i32_20 = arith.constant 1 : i32
        %30 = arith.muli %arg7, %c1_i32_20 : i32
        %c0_i32_21 = arith.constant 0 : i32
        %31 = arith.addi %c0_i32_21, %30 : i32
        %c0_i32_22 = arith.constant 0 : i32
        %32 = arith.addi %c0_i32_22, %31 : i32
        %33 = arith.index_cast %32 : i32 to index
        %34 = memref.load %arg1[%33] : memref<256xi32, #tpu.memory_space<smem>>
        %c0_i32_23 = arith.constant 0 : i32
        %c0_i32_24 = arith.constant 0 : i32
        %c0_i32_25 = arith.constant 0 : i32
        %35 = tpu.memref_slice %arg2[%34, %c0_i32_25] : memref<256x256xf32, #tpu.memory_space<any>> -> memref<1x256xf32, #tpu.memory_space<any>>
        %c0_i32_26 = arith.constant 0 : i32
        %36 = tpu.memref_slice %arg5[%c0_i32_23, %31, %c0_i32_26] : memref<2x128x256xf32, #tpu.memory_space<vmem>> -> memref<1x1x256xf32, #tpu.memory_space<vmem>>
        %37 = tpu.memref_squeeze %36 : memref<1x1x256xf32, #tpu.memory_space<vmem>> -> memref<1x256xf32, #tpu.memory_space<vmem>>
        %38 = tpu.memref_slice %arg6[%c0_i32_24] : memref<2x!tpu.dma_semaphore, #tpu.memory_space<semaphore_mem>> -> memref<1x!tpu.dma_semaphore, #tpu.memory_space<semaphore_mem>>
        %39 = tpu.memref_squeeze %38 : memref<1x!tpu.dma_semaphore, #tpu.memory_space<semaphore_mem>> -> memref<!tpu.dma_semaphore, #tpu.memory_space<semaphore_mem>>
        tpu.enqueue_dma source(%35 : memref<1x256xf32, #tpu.memory_space<any>>) target(%37 : memref<1x256xf32, #tpu.memory_space<vmem>>) target_semaphore(%39 : memref<!tpu.dma_semaphore, #tpu.memory_space<semaphore_mem>>)
      }
      %c128_i32_19 = arith.constant 128 : i32
    } else {
    }
    %c1_i32 = arith.constant 1 : i32
    %3 = arith.addi %arg0, %c1_i32 : i32
    %c2_i32 = arith.constant 2 : i32
    %4 = arith.cmpi slt, %3, %c2_i32 : i32
    %5 = arith.extui %4 : i1 to i32
    %c0_i32_1 = arith.constant 0 : i32
    %6 = arith.cmpi ne, %5, %c0_i32_1 : i32
    scf.if %6 {
      %c1_i32_17 = arith.constant 1 : i32
      %29 = arith.addi %arg0, %c1_i32_17 : i32
      %c2_i32_18 = arith.constant 2 : i32
      %c0_i32_19 = arith.constant 0 : i32
      %30 = arith.cmpi eq, %c2_i32_18, %c0_i32_19 : i32
      %c1_i32_20 = arith.constant 1 : i32
      %31 = arith.select %30, %c1_i32_20, %c2_i32_18 : i32
      %32 = arith.remsi %29, %31 : i32
      %c0_i32_21 = arith.constant 0 : i32
      %33 = arith.cmpi ne, %32, %c0_i32_21 : i32
      %c0_i32_22 = arith.constant 0 : i32
      %34 = arith.cmpi slt, %32, %c0_i32_22 : i32
      %c0_i32_23 = arith.constant 0 : i32
      %35 = arith.cmpi slt, %31, %c0_i32_23 : i32
      %36 = arith.xori %34, %35 : i1
      %37 = arith.andi %36, %33 : i1
      %38 = arith.addi %32, %31 : i32
      %39 = arith.select %37, %38, %32 : i32
      %c128_i32 = arith.constant 128 : i32
      %40 = arith.muli %29, %c128_i32 : i32
      %c0_i32_24 = arith.constant 0 : i32
      %c128_i32_25 = arith.constant 128 : i32
      %41 = arith.addi %c0_i32_24, %c128_i32_25 : i32
      %c1_i32_26 = arith.constant 1 : i32
      scf.for %arg7 = %c0_i32_24 to %41 step %c1_i32_26  : i32 {
        %c1_i32_28 = arith.constant 1 : i32
        %42 = arith.muli %arg7, %c1_i32_28 : i32
        %c0_i32_29 = arith.constant 0 : i32
        %43 = arith.addi %c0_i32_29, %42 : i32
        %44 = arith.addi %40, %43 : i32
        %45 = arith.index_cast %44 : i32 to index
        %46 = memref.load %arg1[%45] : memref<256xi32, #tpu.memory_space<smem>>
        %c0_i32_30 = arith.constant 0 : i32
        %47 = tpu.memref_slice %arg2[%46, %c0_i32_30] : memref<256x256xf32, #tpu.memory_space<any>> -> memref<1x256xf32, #tpu.memory_space<any>>
        %c0_i32_31 = arith.constant 0 : i32
        %48 = tpu.memref_slice %arg5[%39, %43, %c0_i32_31] : memref<2x128x256xf32, #tpu.memory_space<vmem>> -> memref<1x1x256xf32, #tpu.memory_space<vmem>>
        %49 = tpu.memref_squeeze %48 : memref<1x1x256xf32, #tpu.memory_space<vmem>> -> memref<1x256xf32, #tpu.memory_space<vmem>>
        %50 = tpu.memref_slice %arg6[%39] : memref<2x!tpu.dma_semaphore, #tpu.memory_space<semaphore_mem>> -> memref<1x!tpu.dma_semaphore, #tpu.memory_space<semaphore_mem>>
        %51 = tpu.memref_squeeze %50 : memref<1x!tpu.dma_semaphore, #tpu.memory_space<semaphore_mem>> -> memref<!tpu.dma_semaphore, #tpu.memory_space<semaphore_mem>>
        tpu.enqueue_dma source(%47 : memref<1x256xf32, #tpu.memory_space<any>>) target(%49 : memref<1x256xf32, #tpu.memory_space<vmem>>) target_semaphore(%51 : memref<!tpu.dma_semaphore, #tpu.memory_space<semaphore_mem>>)
      }
      %c128_i32_27 = arith.constant 128 : i32
    } else {
    }
    %c2_i32_2 = arith.constant 2 : i32
    %c0_i32_3 = arith.constant 0 : i32
    %7 = arith.cmpi eq, %c2_i32_2, %c0_i32_3 : i32
    %c1_i32_4 = arith.constant 1 : i32
    %8 = arith.select %7, %c1_i32_4, %c2_i32_2 : i32
    %9 = arith.remsi %arg0, %8 : i32
    %c0_i32_5 = arith.constant 0 : i32
    %10 = arith.cmpi ne, %9, %c0_i32_5 : i32
    %c0_i32_6 = arith.constant 0 : i32
    %11 = arith.cmpi slt, %9, %c0_i32_6 : i32
    %c0_i32_7 = arith.constant 0 : i32
    %12 = arith.cmpi slt, %8, %c0_i32_7 : i32
    %13 = arith.xori %11, %12 : i1
    %14 = arith.andi %13, %10 : i1
    %15 = arith.addi %9, %8 : i32
    %16 = arith.select %14, %15, %9 : i32
    %c0_i32_8 = arith.constant 0 : i32
    %c0_i32_9 = arith.constant 0 : i32
    %17 = tpu.memref_slice %arg5[%16, %c0_i32_8, %c0_i32_9] : memref<2x128x256xf32, #tpu.memory_space<vmem>> -> memref<1x128x256xf32, #tpu.memory_space<vmem>>
    %18 = tpu.memref_squeeze %17 : memref<1x128x256xf32, #tpu.memory_space<vmem>> -> memref<128x256xf32, #tpu.memory_space<vmem>>
    %c0_i32_10 = arith.constant 0 : i32
    %c0_i32_11 = arith.constant 0 : i32
    %19 = tpu.memref_slice %arg5[%16, %c0_i32_10, %c0_i32_11] : memref<2x128x256xf32, #tpu.memory_space<vmem>> -> memref<1x128x256xf32, #tpu.memory_space<vmem>>
    %20 = tpu.memref_squeeze %19 : memref<1x128x256xf32, #tpu.memory_space<vmem>> -> memref<128x256xf32, #tpu.memory_space<vmem>>
    %21 = tpu.memref_slice %arg6[%16] : memref<2x!tpu.dma_semaphore, #tpu.memory_space<semaphore_mem>> -> memref<1x!tpu.dma_semaphore, #tpu.memory_space<semaphore_mem>>
    %22 = tpu.memref_squeeze %21 : memref<1x!tpu.dma_semaphore, #tpu.memory_space<semaphore_mem>> -> memref<!tpu.dma_semaphore, #tpu.memory_space<semaphore_mem>>
    tpu.wait_dma2 semaphore(%22 : memref<!tpu.dma_semaphore, #tpu.memory_space<semaphore_mem>>) src(%18 : memref<128x256xf32, #tpu.memory_space<vmem>>) dst(%20 : memref<128x256xf32, #tpu.memory_space<vmem>>)
    %23 = arith.index_cast %16 : i32 to index
    %c0 = arith.constant 0 : index
    %c0_12 = arith.constant 0 : index
    %24 = vector.load %arg5[%23, %c0, %c0_12] : memref<2x128x256xf32, #tpu.memory_space<vmem>>, vector<1x128x256xf32>
    %25 = vector.shape_cast %24 : vector<1x128x256xf32> to vector<128x256xf32>
    %c0_13 = arith.constant 0 : index
    %c0_14 = arith.constant 0 : index
    %26 = vector.load %arg3[%c0_13, %c0_14] : memref<256x128xf32, #tpu.memory_space<vmem>>, vector<256x128xf32>
    %cst = arith.constant dense<0.000000e+00> : vector<128x128xf32>
    %27 = tpu.matmul %25, %26, %cst {dimension_numbers = #tpu.dot_dimension_numbers<[1], [0], [0], [1], [0, 0, 1, 1], [], []>} : vector<128x256xf32>, vector<256x128xf32>, vector<128x128xf32> -> vector<128x128xf32>
    %c0_15 = arith.constant 0 : index
    %c0_16 = arith.constant 0 : index
    %28 = vector.load %arg4[%c0_15, %c0_16] : memref<128x128xf32, #tpu.memory_space<vmem>>, vector<128x128xf32>
    tpu.vector_store %arg4[%c0_15, %c0_16], %27 {strides = array<i32>} : memref<128x128xf32, #tpu.memory_space<vmem>>, vector<128x128xf32>,
    return
  }
  func.func @transform_1(%arg0: i32, %arg1: memref<256xi32, #tpu.memory_space<smem>>) -> (i32, i32) {
    %c0_i32 = arith.constant 0 : i32
    %c0_i32_0 = arith.constant 0 : i32
    %c0_i32_1 = arith.constant 0 : i32
    return %c0_i32, %c0_i32_0 : i32, i32
  }
  func.func @transform_2(%arg0: i32, %arg1: memref<256xi32, #tpu.memory_space<smem>>) -> (i32, i32) {
    %c0_i32 = arith.constant 0 : i32
    %c0_i32_0 = arith.constant 0 : i32
    return %arg0, %c0_i32 : i32, i32
  }
}

</mosaic_0001>

<llo_original>
// kernel: tpu_custom_call.1
$region0: #{tpu_custom_call.1}
  #allocation0 [shape = 'u32[]', space=smem, size = 0x4, offset = 0x4, fixed_abs, tag = 'smem constant byte address 0x4 - core index']
  #allocation1 [shape = 'u32[144,128]{1,0:T(1,128)}', space=vmem, size = 0x12000, scoped, tag = 'internal scratch']
  #allocation2 [shape = 'f32[2,128,256]{2,1,0:T(8,128)}', space=vmem, size = 0x40000, scoped, tag = 'scratch operand']
  #allocation3 [shape = 's32[2]{0}', space=sflag, size = 0x8, scoped, tag = 'scratch operand']
  #allocation4 [shape = 's32[1]{0}', space=sflag, size = 0x4, scoped, tag = 'scoped memory for tpu_custom_call.1']
  #allocation5 [shape = 'u8[1024]{0}', space=smem, size = 0x400, scoped, tag = 'prefetched SMEM operand 0']
  #allocation10 [shape = 's32[]', space=sflag, size = 0x4, offset = 0, fixed_abs, tag = 'sflag constant byte address 0x0 - dummy sync flag']
  #allocation11 [shape = 's32[]', space=sflag, size = 0x4, offset = 0, fixed_abs, tag = 'sflag constant byte address 0x0 - dummy sync flag']
  %s0 = inlined_call_operand.hbm [shape: s32[256], index: 0, kind: input, shape index: {}]
  %s1 = inlined_call_operand.hbm [shape: f32[256,256], index: 1, kind: input, shape index: {}]
  %s2 = inlined_call_operand.hbm [shape: f32[256,128], index: 2, kind: input, shape index: {}]
  %s3 = inlined_call_operand.hbm [shape: f32[256,128], index: 3, kind: output, shape index: {}]
  %s4 = sld [smem:[#allocation0]]
  $region63: #{tpu_custom_call.1} parent=0
    _
  %s6 = ssub.s32 1, %s4
  %s7 = scalar_select 0, %s6, %s4
  %9 = dma.hbm_to_smem %s0, 32, [#allocation5], [#allocation4]
  %10 = dma.done [#allocation4], 32
  %11 = sfence
  $region1: #{tpu_custom_call.1} parent=0
    #allocation6 [shape = 'u8[131072]{0}', space=vmem, size = 0x20000, scoped, tag = 'input window, operand 2, single buffered']
    #allocation7 [shape = 's32[2]{0}', space=sflag, size = 0x8, scoped, tag = 'scoped memory for tpu_custom_call.1']
    #allocation8 [shape = 's32[2]{0}', space=sflag, size = 0x8, scoped, tag = 'scoped memory for tpu_custom_call.1']
    #allocation9 [shape = 'u8[131072]{0}', space=vmem, size = 0x20000, scoped, tag = 'output window, operand 0']
    %12 = vsyncpa [#allocation7], 0
    %13 = vsyncpa [#allocation8], 0
    %s14 = scalar_lea.sflag [#allocation8], 1
    %15 = vsyncpa %s14, 0
    loop: start=0, step=1, limit=4
    $region2: #{tpu_custom_call.1} parent=1 // loop_pre_header
      _
    $region3: #{tpu_custom_call.1} parent=1 // loop_header
      %s17 = sphi 0, %s21
      %p18 = scmp.ge.s32.totalorder %s17, 4
      %s25 = sphi 0, %s25
      %s27 = sphi 0, %s25
      %s28 = sphi 0, %s27
      %s42 = sphi 0, %s28
      %s48 = sphi 0, %s50
      %s51 = sphi 0, %s48
      %s52 = sphi 0, %s51
      %s68 = sphi 0, %s52
    $region4: #{tpu_custom_call.1} parent=1 // loop_header_branch
      %20 = sbr.rel (%p18) target = $region8
    $region5: #{tpu_custom_call.1} parent=1 // loop_body
      %s22 = ssub.s32 %s17, 1
      %s23 = ssub.s32 %s17, 2
      %s24 = sadd.s32 %s17, 1
      %s26 = sadd.s32 %s25, 1
      %p29 = scmp.eq.s32.totalorder %s17, 1
      %p30 = scmp.ne.s32.totalorder %s25, %s27
      %p31 = scmp.eq.s32.totalorder %s17, 0
      %p32 = por %p30, %p31
      %p33 = scmp.ne.s32.totalorder %s25, %s27
      %p34 = scmp.eq.s32.totalorder %s22, 1
      %p35 = por %p33, %p34
      %p36 = scmp.ne.s32.totalorder %s27, %s28
      %p37 = scmp.eq.s32.totalorder %s22, 0
      %p38 = por %p36, %p37
      %p39 = scmp.ne.s32.totalorder %s27, %s28
      %p40 = scmp.eq.s32.totalorder %s23, 1
      %p41 = por %p39, %p40
      %p43 = scmp.ne.s32.totalorder %s28, %s42
      %p44 = scmp.eq.s32.totalorder %s23, 0
      %p45 = por %p43, %p44
      %s46 = ssub.s32 %s17, %s24
      %p47 = scmp.eq.s32.totalorder %s46, 0
      %s49 = sadd.s32 %s48, 1
      %s50 = scalar_select %p47, %s48, %s49
      %p53 = pneg %p47
      %p54 = scmp.eq.s32.totalorder %s17, 1
      %p55 = por %p53, %p54
      %p56 = scmp.ne.s32.totalorder %s48, %s51
      %p57 = scmp.eq.s32.totalorder %s17, 0
      %p58 = por %p56, %p57
      %p59 = scmp.ne.s32.totalorder %s48, %s51
      %p60 = scmp.eq.s32.totalorder %s22, 1
      %p61 = por %p59, %p60
      %p62 = scmp.ne.s32.totalorder %s51, %s52
      %p63 = scmp.eq.s32.totalorder %s22, 0
      %p64 = por %p62, %p63
      %p65 = scmp.ne.s32.totalorder %s51, %s52
      %p66 = scmp.eq.s32.totalorder %s23, 1
      %p67 = por %p65, %p66
      %p69 = scmp.ne.s32.totalorder %s52, %s68
      %p70 = scmp.eq.s32.totalorder %s23, 0
      %p71 = por %p69, %p70
      %p72 = scmp.le.s32.totalorder 1, %s17
      %p73 = scmp.lt.s32.totalorder %s17, 3
      %p74 = pnand %p72, %p73
      %p75 = pneg %p74
      // Predicated region
      $region9: #{tpu_custom_call.1} parent=5 // pred_check
        _
      $region10: #{tpu_custom_call.1} parent=5 // pred_check_branch
        %77 = sbr.rel (%p74) target = $region12
      $region11: #{tpu_custom_call.1} parent=5 // pred_region
        %s78 = ssub.s32 %s17, 1
        // Predicated region
        $region13: #{tpu_custom_call.1} parent=11 // pred_check
          %p79 = pneg %p38
        $region14: #{tpu_custom_call.1} parent=11 // pred_check_branch
          %81 = sbr.rel (%p79) target = $region16
        $region15: #{tpu_custom_call.1} parent=11 // pred_region
          %s83 = ssub.s32 4096, 4096
          %84 = vsyncadd [#allocation7], %s83
          %s85 = sshll.u32 [#allocation6], 4
          %s86 = int_to_ptr.vmem [resolvable:$true] %s85
          %91 = dma.hbm_to_vmem [thread:$0]  %s2, 4096, %s86, [#allocation7], 128, 128, 8
        $region16: #{tpu_custom_call.1} parent=11 // pred_fallthru
          _
      $region12: #{tpu_custom_call.1} parent=5 // pred_fallthru
        _
      %p92 = scmp.lt.s32.totalorder %s17, 2
      // Predicated region
      $region17: #{tpu_custom_call.1} parent=5 // pred_check
        %p93 = pneg %p92
      $region18: #{tpu_custom_call.1} parent=5 // pred_check_branch
        %95 = sbr.rel (%p93) target = $region20
      $region19: #{tpu_custom_call.1} parent=5 // pred_region
        _
      $region20: #{tpu_custom_call.1} parent=5 // pred_fallthru
        _
      %p96 = scmp.le.s32.totalorder 1, %s17
      %p97 = scmp.lt.s32.totalorder %s17, 3
      %p98 = pnand %p96, %p97
      %p99 = pneg %p98
      // Predicated region
      $region21: #{tpu_custom_call.1} parent=5 // pred_check
        _
      $region22: #{tpu_custom_call.1} parent=5 // pred_check_branch
        %101 = sbr.rel (%p98) target = $region24
      $region23: #{tpu_custom_call.1} parent=5 // pred_region
        %s102 = ssub.s32 %s17, 1
        // Predicated region
        $region25: #{tpu_custom_call.1} parent=23 // pred_check
          %p103 = pneg %p38
        $region26: #{tpu_custom_call.1} parent=23 // pred_check_branch
          %105 = sbr.rel (%p103) target = $region28
        $region27: #{tpu_custom_call.1} parent=23 // pred_region
          %106 = dma.done [#allocation7], 4096
        $region28: #{tpu_custom_call.1} parent=23 // pred_fallthru
          _
        %p107 = pneg %p38
        %p108 = pneg %p35
        %p109 = pneg %p64
        %p110 = pneg %p61
        %s111 = sand.u32 %s51, 1
        %s112 = scalar_lea.sflag [#allocation8], %s111
        %s113 = sand.u32 %s51, 1
        %s114 = smul.addr %s113, 128
        %s115 = scalar_lea.vmem [#allocation9], %s114
        %s116 = smul.u32 16, %s22
        %p117 = scmp.eq.s32.totalorder %s22, 0
        // Predicated region
        $region29: #{tpu_custom_call.1} parent=23 // pred_check
          %p118 = pneg %p117
        $region30: #{tpu_custom_call.1} parent=23 // pred_check_branch
          %120 = sbr.rel (%p118) target = $region32
        $region31: #{tpu_custom_call.1} parent=23 // pred_region
          loop: start=0, step=1, limit=128
          $region33: #{tpu_custom_call.1} parent=31 // loop_pre_header
            _
          $region34: #{tpu_custom_call.1} parent=31 // loop_header
            %s122 = sphi 0, %s126
            %p123 = scmp.ge.s32.totalorder %s122, 128
          $region35: #{tpu_custom_call.1} parent=31 // loop_header_branch
            %125 = sbr.rel (%p123) target = $region39
          $region36: #{tpu_custom_call.1} parent=31 // loop_body
            %s127 = sld [smem:[#allocation5 + %s122]]
            %s128 = sshrl.u32 %s127, 3
            %s129 = sand.u32 %s127, 7
            %s130 = smul.u32 %s128, 16
            %s131 = sadd.s32 %s129, %s130
            %s132 = smul.addr %s131, 16
            %s133 = scalar_lea.hbm %s1, %s132
            %s134 = sshrl.u32 %s122, 3
            %s135 = sand.u32 %s122, 7
            %s136 = smul.u32 %s134, 16
            %s137 = sadd.s32 %s135, %s136
            %s138 = scalar_lea.vmem [#allocation2], %s137
            %s140 = sshll.u32 %s138, 4
            %s141 = int_to_ptr.vmem [resolvable:$true] %s140
            %143 = dma.hbm_to_vmem [thread:$0]  %s133, 32, %s141, [#allocation3], 128, 128, 1
          $region37: #{tpu_custom_call.1} parent=31 // loop_footer
            %s126 = sadd.s32 1, %s122
          $region38: #{tpu_custom_call.1} parent=31 // loop_footer_branch
            %121 = sbr.rel target = $region34
          $region39: #{tpu_custom_call.1} parent=31 // loop_exit
            _
        $region32: #{tpu_custom_call.1} parent=23 // pred_fallthru
          _
        %s144 = sadd.s32 %s22, 1
        %p145 = scmp.lt.s32.totalorder %s144, 2
        // Predicated region
        $region40: #{tpu_custom_call.1} parent=23 // pred_check
          %p146 = pneg %p145
        $region41: #{tpu_custom_call.1} parent=23 // pred_check_branch
          %148 = sbr.rel (%p146) target = $region43
        $region42: #{tpu_custom_call.1} parent=23 // pred_region
          %p149 = scmp.lt.s32.totalorder %s144, 0
          %s150 = ssub.s32 0, %s144
          %s151 = scalar_select %p149, %s150, %s144
          %s152 = sand.u32 %s151, 1
          %s153 = ssub.s32 0, %s152
          %s154 = scalar_select %p149, %s153, %s152
          %p155 = scmp.ne.s32.totalorder %s154, 0
          %p156 = scmp.lt.s32.totalorder %s154, 0
          %p157 = pnand %p156, %p155
          %p158 = pneg %p157
          %s159 = sadd.s32 %s154, 2
          %s160 = scalar_select %p158, %s159, %s154
          %s161 = smul.u32 %s144, 128
          loop: start=0, step=1, limit=128
          $region44: #{tpu_custom_call.1} parent=42 // loop_pre_header
            _
          $region45: #{tpu_custom_call.1} parent=42 // loop_header
            %s163 = sphi 0, %s167
            %p164 = scmp.ge.s32.totalorder %s163, 128
          $region46: #{tpu_custom_call.1} parent=42 // loop_header_branch
            %166 = sbr.rel (%p164) target = $region50
          $region47: #{tpu_custom_call.1} parent=42 // loop_body
            %s168 = sadd.s32 %s161, %s163
            %s169 = sld [smem:[#allocation5 + %s168]]
            %s170 = sshrl.u32 %s169, 3
            %s171 = sand.u32 %s169, 7
            %s172 = smul.u32 %s170, 16
            %s173 = sadd.s32 %s171, %s172
            %s174 = smul.addr %s173, 16
            %s175 = scalar_lea.hbm %s1, %s174
            %s176 = sshrl.u32 %s163, 3
            %s177 = sand.u32 %s163, 7
            %s178 = smul.u32 %s176, 16
            %s179 = sadd.s32 %s177, %s178
            %s180 = smul.u32 %s160, 256
            %s181 = sadd.s32 %s179, %s180
            %s182 = scalar_lea.vmem [#allocation2], %s181
            %s183 = scalar_lea.sflag [#allocation3], %s160
            %s185 = sshll.u32 %s182, 4
            %s186 = int_to_ptr.vmem [resolvable:$true] %s185
            %188 = dma.hbm_to_vmem [thread:$0]  %s175, 32, %s186, %s183, 128, 128, 1
          $region48: #{tpu_custom_call.1} parent=42 // loop_footer
            %s167 = sadd.s32 1, %s163
          $region49: #{tpu_custom_call.1} parent=42 // loop_footer_branch
            %162 = sbr.rel target = $region45
          $region50: #{tpu_custom_call.1} parent=42 // loop_exit
            _
        $region43: #{tpu_custom_call.1} parent=23 // pred_fallthru
          _
        %p189 = scmp.lt.s32.totalorder %s22, 0
        %s190 = ssub.s32 0, %s22
        %s191 = scalar_select %p189, %s190, %s22
        %s192 = sand.u32 %s191, 1
        %s193 = ssub.s32 0, %s192
        %s194 = scalar_select %p189, %s193, %s192
        %p195 = scmp.ne.s32.totalorder %s194, 0
        %p196 = scmp.lt.s32.totalorder %s194, 0
        %p197 = pnand %p196, %p195
        %p198 = pneg %p197
        %s199 = sadd.s32 %s194, 2
        %s200 = scalar_select %p198, %s199, %s194
        %s201 = smul.u32 %s200, 32
        %s202 = smul.addr %s201, 8
        %s203 = scalar_lea.vmem [#allocation2], %s202
        %s204 = scalar_lea.sflag [#allocation3], %s200
        %s205 = smul.u32 8, 16
        %s206 = smul.u32 %s205, 2
        %s207 = sshll.u32 %s206, 4
        %208 = dma.done %s204, %s207
        %v209 = vld [vmem:[%s203] sm:$0xff]
        %v210 = vld [vmem:[%s203 + $0x8] sm:$0xff]
        %v211 = vld [vmem:[%s203 + $0x10] sm:$0xff]
        %v212 = vld [vmem:[%s203 + $0x18] sm:$0xff]
        %v213 = vld [vmem:[%s203 + $0x20] sm:$0xff]
        %v214 = vld [vmem:[%s203 + $0x28] sm:$0xff]
        %v215 = vld [vmem:[%s203 + $0x30] sm:$0xff]
        %v216 = vld [vmem:[%s203 + $0x38] sm:$0xff]
        %v217 = vld [vmem:[%s203 + $0x40] sm:$0xff]
        %v218 = vld [vmem:[%s203 + $0x48] sm:$0xff]
        %v219 = vld [vmem:[%s203 + $0x50] sm:$0xff]
        %v220 = vld [vmem:[%s203 + $0x58] sm:$0xff]
        %v221 = vld [vmem:[%s203 + $0x60] sm:$0xff]
        %v222 = vld [vmem:[%s203 + $0x68] sm:$0xff]
        %v223 = vld [vmem:[%s203 + $0x70] sm:$0xff]
        %v224 = vld [vmem:[%s203 + $0x78] sm:$0xff]
        %v225 = vld [vmem:[%s203 + $0x80] sm:$0xff]
        %v226 = vld [vmem:[%s203 + $0x88] sm:$0xff]
        %v227 = vld [vmem:[%s203 + $0x90] sm:$0xff]
        %v228 = vld [vmem:[%s203 + $0x98] sm:$0xff]
        %v229 = vld [vmem:[%s203 + $0xa0] sm:$0xff]
        %v230 = vld [vmem:[%s203 + $0xa8] sm:$0xff]
        %v231 = vld [vmem:[%s203 + $0xb0] sm:$0xff]
        %v232 = vld [vmem:[%s203 + $0xb8] sm:$0xff]
        %v233 = vld [vmem:[%s203 + $0xc0] sm:$0xff]
        %v234 = vld [vmem:[%s203 + $0xc8] sm:$0xff]
        %v235 = vld [vmem:[%s203 + $0xd0] sm:$0xff]
        %v236 = vld [vmem:[%s203 + $0xd8] sm:$0xff]
        %v237 = vld [vmem:[%s203 + $0xe0] sm:$0xff]
        %v238 = vld [vmem:[%s203 + $0xe8] sm:$0xff]
        %v239 = vld [vmem:[%s203 + $0xf0] sm:$0xff]
        %v240 = vld [vmem:[%s203 + $0xf8] sm:$0xff]
        %v241 = vld [vmem:[#allocation6] sm:$0xff]
        %v242 = vld [vmem:[#allocation6 + $0x8] sm:$0xff]
        %v243 = vld [vmem:[#allocation6 + $0x10] sm:$0xff]
        %v244 = vld [vmem:[#allocation6 + $0x18] sm:$0xff]
        %v245 = vld [vmem:[#allocation6 + $0x20] sm:$0xff]
        %v246 = vld [vmem:[#allocation6 + $0x28] sm:$0xff]
        %v247 = vld [vmem:[#allocation6 + $0x30] sm:$0xff]
        %v248 = vld [vmem:[#allocation6 + $0x38] sm:$0xff]
        %v249 = vld [vmem:[#allocation6 + $0x40] sm:$0xff]
        %v250 = vld [vmem:[#allocation6 + $0x48] sm:$0xff]
        %v251 = vld [vmem:[#allocation6 + $0x50] sm:$0xff]
        %v252 = vld [vmem:[#allocation6 + $0x58] sm:$0xff]
        %v253 = vld [vmem:[#allocation6 + $0x60] sm:$0xff]
        %v254 = vld [vmem:[#allocation6 + $0x68] sm:$0xff]
        %v255 = vld [vmem:[#allocation6 + $0x70] sm:$0xff]
        %v256 = vld [vmem:[#allocation6 + $0x78] sm:$0xff]
        %v257 = vld [vmem:[#allocation6 + $0x80] sm:$0xff]
        %v258 = vld [vmem:[#allocation6 + $0x88] sm:$0xff]
        %v259 = vld [vmem:[#allocation6 + $0x90] sm:$0xff]
        %v260 = vld [vmem:[#allocation6 + $0x98] sm:$0xff]
        %v261 = vld [vmem:[#allocation6 + $0xa0] sm:$0xff]
        %v262 = vld [vmem:[#allocation6 + $0xa8] sm:$0xff]
        %v263 = vld [vmem:[#allocation6 + $0xb0] sm:$0xff]
        %v264 = vld [vmem:[#allocation6 + $0xb8] sm:$0xff]
        %v265 = vld [vmem:[#allocation6 + $0xc0] sm:$0xff]
        %v266 = vld [vmem:[#allocation6 + $0xc8] sm:$0xff]
        %v267 = vld [vmem:[#allocation6 + $0xd0] sm:$0xff]
        %v268 = vld [vmem:[#allocation6 + $0xd8] sm:$0xff]
        %v269 = vld [vmem:[#allocation6 + $0xe0] sm:$0xff]
        %v270 = vld [vmem:[#allocation6 + $0xe8] sm:$0xff]
        %v271 = vld [vmem:[#allocation6 + $0xf0] sm:$0xff]
        %v272 = vld [vmem:[#allocation6 + $0xf8] sm:$0xff]
        %273 = vmatprep.subr.mxu0 0.0
        %274 = vmatpush1.msra.mxu0 %v241
        %275 = vmatprep.subr.mxu0 0.0
        %276 = vmatpush1.msra.mxu0 %v242
        %277 = vmatprep.subr.mxu0 0.0
        %278 = vmatpush1.msra.mxu0 %v243
        %279 = vmatprep.subr.mxu0 0.0
        %280 = vmatpush1.msra.mxu0 %v244
        %281 = vmatprep.subr.mxu0 0.0
        %282 = vmatpush1.msra.mxu0 %v245
        %283 = vmatprep.subr.mxu0 0.0
        %284 = vmatpush1.msra.mxu0 %v246
        %285 = vmatprep.subr.mxu0 0.0
        %286 = vmatpush1.msra.mxu0 %v247
        %287 = vmatprep.subr.mxu0 0.0
        %288 = vmatpush1.msra.mxu0 %v248
        %289 = vmatprep.subr.mxu0 0.0
        %290 = vmatpush1.msra.mxu0 %v249
        %291 = vmatprep.subr.mxu0 0.0
        %292 = vmatpush1.msra.mxu0 %v250
        %293 = vmatprep.subr.mxu0 0.0
        %294 = vmatpush1.msra.mxu0 %v251
        %295 = vmatprep.subr.mxu0 0.0
        %296 = vmatpush1.msra.mxu0 %v252
        %297 = vmatprep.subr.mxu0 0.0
        %298 = vmatpush1.msra.mxu0 %v253
        %299 = vmatprep.subr.mxu0 0.0
        %300 = vmatpush1.msra.mxu0 %v254
        %301 = vmatprep.subr.mxu0 0.0
        %302 = vmatpush1.msra.mxu0 %v255
        %303 = vmatprep.subr.mxu0 0.0
        %304 = vmatpush1.msra.mxu0 %v256
        %305 = vmatprep.subr.mxu0 0.0
        %306 = vmatpush1.msra.mxu0 %v257
        %307 = vmatprep.subr.mxu0 0.0
        %308 = vmatpush1.msra.mxu0 %v258
        %309 = vmatprep.subr.mxu0 0.0
        %310 = vmatpush1.msra.mxu0 %v259
        %311 = vmatprep.subr.mxu0 0.0
        %312 = vmatpush1.msra.mxu0 %v260
        %313 = vmatprep.subr.mxu0 0.0
        %314 = vmatpush1.msra.mxu0 %v261
        %315 = vmatprep.subr.mxu0 0.0
        %316 = vmatpush1.msra.mxu0 %v262
        %317 = vmatprep.subr.mxu0 0.0
        %318 = vmatpush1.msra.mxu0 %v263
        %319 = vmatprep.subr.mxu0 0.0
        %320 = vmatpush1.msra.mxu0 %v264
        %321 = vmatprep.subr.mxu0 0.0
        %322 = vmatpush1.msra.mxu0 %v265
        %323 = vmatprep.subr.mxu0 0.0
        %324 = vmatpush1.msra.mxu0 %v266
        %325 = vmatprep.subr.mxu0 0.0
        %326 = vmatpush1.msra.mxu0 %v267
        %327 = vmatprep.subr.mxu0 0.0
        %328 = vmatpush1.msra.mxu0 %v268
        %329 = vmatprep.subr.mxu0 0.0
        %330 = vmatpush1.msra.mxu0 %v269
        %331 = vmatprep.subr.mxu0 0.0
        %332 = vmatpush1.msra.mxu0 %v270
        %333 = vmatprep.subr.mxu0 0.0
        %334 = vmatpush1.msra.mxu0 %v271
        %335 = vmatprep.subr.mxu0 0.0
        %336 = vmatpush1.msra.mxu0 %v272
        %337 = vmatprep.mubr.f32.mxu0 %v210
        %338 = vmatmul.mubr.f32.gmra.mrb[0].mxu0 %v209
        %v339 = vpop.f32.mrb[0].mxu0
        %v340 = vadd.f32 0.0, %v339
        %v341 = vpop.f32.mrb[0].mxu0
        %342 = vmatprep.mubr.f32.mxu0 %v212
        %343 = vmatmul.mubr.f32.gmra.mrb[0].mxu0 %v211
        %v344 = vpop.f32.mrb[0].mxu0
        %v345 = vadd.f32 0.0, %v344
        %v346 = vpop.f32.mrb[0].mxu0
        %347 = vmatprep.mubr.f32.mxu0 %v214
        %348 = vmatmul.mubr.f32.gmra.mrb[0].mxu0 %v213
        %v349 = vpop.f32.mrb[0].mxu0
        %v350 = vadd.f32 0.0, %v349
        %v351 = vpop.f32.mrb[0].mxu0
        %352 = vmatprep.mubr.f32.mxu0 %v216
        %353 = vmatmul.mubr.f32.gmra.mrb[0].mxu0 %v215
        %v354 = vpop.f32.mrb[0].mxu0
        %v355 = vadd.f32 0.0, %v354
        %v356 = vpop.f32.mrb[0].mxu0
        %357 = vmatprep.mubr.f32.mxu0 %v218
        %358 = vmatmul.mubr.f32.gmra.mrb[0].mxu0 %v217
        %v359 = vpop.f32.mrb[0].mxu0
        %v360 = vadd.f32 0.0, %v359
        %v361 = vpop.f32.mrb[0].mxu0
        %362 = vmatprep.mubr.f32.mxu0 %v220
        %363 = vmatmul.mubr.f32.gmra.mrb[0].mxu0 %v219
        %v364 = vpop.f32.mrb[0].mxu0
        %v365 = vadd.f32 0.0, %v364
        %v366 = vpop.f32.mrb[0].mxu0
        %367 = vmatprep.mubr.f32.mxu0 %v222
        %368 = vmatmul.mubr.f32.gmra.mrb[0].mxu0 %v221
        %v369 = vpop.f32.mrb[0].mxu0
        %v370 = vadd.f32 0.0, %v369
        %v371 = vpop.f32.mrb[0].mxu0
        %372 = vmatprep.mubr.f32.mxu0 %v224
        %373 = vmatmul.mubr.f32.gmra.mrb[0].mxu0 %v223
        %v374 = vpop.f32.mrb[0].mxu0
        %v375 = vadd.f32 0.0, %v374
        %v376 = vpop.f32.mrb[0].mxu0
        %377 = vmatprep.mubr.f32.mxu0 %v226
        %378 = vmatmul.mubr.f32.gmra.mrb[0].mxu0 %v225
        %v379 = vpop.f32.mrb[0].mxu0
        %v380 = vadd.f32 0.0, %v379
        %v381 = vpop.f32.mrb[0].mxu0
        %382 = vmatprep.mubr.f32.mxu0 %v228
        %383 = vmatmul.mubr.f32.gmra.mrb[0].mxu0 %v227
        %v384 = vpop.f32.mrb[0].mxu0
        %v385 = vadd.f32 0.0, %v384
        %v386 = vpop.f32.mrb[0].mxu0
        %387 = vmatprep.mubr.f32.mxu0 %v230
        %388 = vmatmul.mubr.f32.gmra.mrb[0].mxu0 %v229
        %v389 = vpop.f32.mrb[0].mxu0
        %v390 = vadd.f32 0.0, %v389
        %v391 = vpop.f32.mrb[0].mxu0
        %392 = vmatprep.mubr.f32.mxu0 %v232
        %393 = vmatmul.mubr.f32.gmra.mrb[0].mxu0 %v231
        %v394 = vpop.f32.mrb[0].mxu0
        %v395 = vadd.f32 0.0, %v394
        %v396 = vpop.f32.mrb[0].mxu0
        %397 = vmatprep.mubr.f32.mxu0 %v234
        %398 = vmatmul.mubr.f32.gmra.mrb[0].mxu0 %v233
        %v399 = vpop.f32.mrb[0].mxu0
        %v400 = vadd.f32 0.0, %v399
        %v401 = vpop.f32.mrb[0].mxu0
        %402 = vmatprep.mubr.f32.mxu0 %v236
        %403 = vmatmul.mubr.f32.gmra.mrb[0].mxu0 %v235
        %v404 = vpop.f32.mrb[0].mxu0
        %v405 = vadd.f32 0.0, %v404
        %v406 = vpop.f32.mrb[0].mxu0
        %407 = vmatprep.mubr.f32.mxu0 %v238
        %408 = vmatmul.mubr.f32.gmra.mrb[0].mxu0 %v237
        %v409 = vpop.f32.mrb[0].mxu0
        %v410 = vadd.f32 0.0, %v409
        %v411 = vpop.f32.mrb[0].mxu0
        %412 = vmatprep.mubr.f32.mxu0 %v240
        %413 = vmatmul.mubr.f32.gmra.mrb[0].mxu0 %v239
        %v414 = vpop.f32.mrb[0].mxu0
        %v415 = vadd.f32 0.0, %v414
        %v416 = vpop.f32.mrb[0].mxu0
        %417 = vdwg.mxu0
        %418 = vst [vmem:[%s115] sm:$0xff] %v340
        %419 = vst [vmem:[%s115 + $0x8] sm:$0xff] %v345
        %420 = vst [vmem:[%s115 + $0x10] sm:$0xff] %v350
        %421 = vst [vmem:[%s115 + $0x18] sm:$0xff] %v355
        %422 = vst [vmem:[%s115 + $0x20] sm:$0xff] %v360
        %423 = vst [vmem:[%s115 + $0x28] sm:$0xff] %v365
        %424 = vst [vmem:[%s115 + $0x30] sm:$0xff] %v370
        %425 = vst [vmem:[%s115 + $0x38] sm:$0xff] %v375
        %426 = vst [vmem:[%s115 + $0x40] sm:$0xff] %v380
        %427 = vst [vmem:[%s115 + $0x48] sm:$0xff] %v385
        %428 = vst [vmem:[%s115 + $0x50] sm:$0xff] %v390
        %429 = vst [vmem:[%s115 + $0x58] sm:$0xff] %v395
        %430 = vst [vmem:[%s115 + $0x60] sm:$0xff] %v400
        %431 = vst [vmem:[%s115 + $0x68] sm:$0xff] %v405
        %432 = vst [vmem:[%s115 + $0x70] sm:$0xff] %v410
        %433 = vst [vmem:[%s115 + $0x78] sm:$0xff] %v415
        %s434 = sand.u32 %s51, 1
        %s435 = scalar_lea.sflag [#allocation8], %s434
        %s436 = sand.u32 %s51, 1
        %s437 = smul.addr %s436, 128
        %s438 = scalar_lea.vmem [#allocation9], %s437
        // Predicated region
        $region51: #{tpu_custom_call.1} parent=23 // pred_check
          %p439 = pneg %p61
        $region52: #{tpu_custom_call.1} parent=23 // pred_check_branch
          %441 = sbr.rel (%p439) target = $region54
        $region53: #{tpu_custom_call.1} parent=23 // pred_region
          %s442 = smul.u32 16, %s22
          %s444 = ssub.s32 2048, 2048
          %445 = vsyncadd %s435, %s444
          %s446 = smul.addr %s442, 128
          %s447 = scalar_lea.hbm %s3, %s446
          %s448 = sshll.u32 %s438, 4
          %s449 = int_to_ptr.vmem [resolvable:$true] %s448
          %454 = dma.vmem_to_hbm [thread:$0]  %s449, 2048, %s447, %s435, 128, 128, 8
        $region54: #{tpu_custom_call.1} parent=23 // pred_fallthru
          _
      $region24: #{tpu_custom_call.1} parent=5 // pred_fallthru
        _
      %p455 = scmp.le.s32.totalorder 2, %s17
      // Predicated region
      $region55: #{tpu_custom_call.1} parent=5 // pred_check
        %p456 = pneg %p455
      $region56: #{tpu_custom_call.1} parent=5 // pred_check_branch
        %458 = sbr.rel (%p456) target = $region58
      $region57: #{tpu_custom_call.1} parent=5 // pred_region
        %s459 = ssub.s32 %s17, 2
        // Predicated region
        $region59: #{tpu_custom_call.1} parent=57 // pred_check
          %p460 = pneg %p67
        $region60: #{tpu_custom_call.1} parent=57 // pred_check_branch
          %462 = sbr.rel (%p460) target = $region62
        $region61: #{tpu_custom_call.1} parent=57 // pred_region
          %s463 = sand.u32 %s52, 1
          %s464 = scalar_lea.sflag [#allocation8], %s463
          %s465 = sand.u32 %s52, 1
          %s466 = smul.addr %s465, 128
          %s467 = scalar_lea.vmem [#allocation9], %s466
          %468 = dma.done %s464, 2048
        $region62: #{tpu_custom_call.1} parent=57 // pred_fallthru
          _
      $region58: #{tpu_custom_call.1} parent=5 // pred_fallthru
        _
    $region6: #{tpu_custom_call.1} parent=1 // loop_footer
      %s21 = sadd.s32 1, %s17
    $region7: #{tpu_custom_call.1} parent=1 // loop_footer_branch
      %16 = sbr.rel target = $region3
    $region8: #{tpu_custom_call.1} parent=1 // loop_exit
      _
    %469 = vsyncpa [#allocation7], 1
    %s470 = scalar_lea.sflag [#allocation7], 1
    %471 = vsyncpa %s470, 1
    %472 = vsyncpa [#allocation8], 1
    %s473 = scalar_lea.sflag [#allocation8], 1
    %474 = vsyncpa %s473, 1
  %475 = vsyncmov [#allocation3]
  %s476 = vpop.sfrf %475
  %p477 = scmp.eq.s32.totalorder %s476, 0
  %p478 = pneg %p477
  %480 = shalt.err (%p478)
  %s481 = scalar_lea.sflag [#allocation3], 1
  %482 = vsyncmov %s481
  %s483 = vpop.sfrf %482
  %p484 = scmp.eq.s32.totalorder %s483, 0
  %p485 = pneg %p484
  %487 = shalt.err (%p485)

</llo_original>
